<compile_context>
chip_gen: v5e
topology: v5e:2x2
jax: 0.10.0
libtpu: 0.0.40
codegen_flags: <defaults>
</compile_context>

<pallas_src>
import jax
import jax.numpy as jnp
from jax.experimental import pallas as pl
from jax.experimental.pallas import tpu as pltpu

NUM_CHANNELS = 16            # num_channels == num_hidden_channels in the module
HIDDEN = 32                  # update_net hidden width
_MIN_PALLAS_N = 128          # below this, fused XLA beats any Pallas launch
_MAX_ROW_TILE = 1024         # lane-axis tile cap (512+ reaches ~85% HBM roofline)
_A_DBLBUF_BUDGET = 20 << 20  # double-buffered A_hat^T tile budget (v7x: 64 MiB VMEM)


def _gnca_kernel(xk_ref, at_ref, xr_ref, wf_ref, b1_ref, w2_ref, b2_ref, out_ref):
    """One (batch, row-tile) grid step, feature-major layout, straight-line body.

    xk_ref : (C, Np)  agg_dtype  x^T, full padded node width (reduction side)
    at_ref : (Np, TM) agg_dtype  A_hat^T column block (the O(N^2) stream)
    xr_ref : (C, TM)  f32        x^T block for the residual
    wf_ref : (H, C)   agg_dtype  (Wg @ W1)^T  -- fused perception + layer 1
    b1_ref : (H, 1)   f32
    w2_ref : (C, H)   agg_dtype
    b2_ref : (C, 1)   f32
    out_ref: (C, TM)  f32        (xx + update)^T
    """
    # agg^T = x^T @ A_hat^T : the only O(N^2) contraction (width C), f32 MXU acc.
    agg = jnp.dot(xk_ref[...], at_ref[...], preferred_element_type=jnp.float32)
    # update^T = W2^T @ relu(Wf^T @ agg^T + b1) + b2.  Epilogue matmul operands
    # are narrowed to the streaming dtype (v5e MXU has no f32 path); bias /
    # ReLU / residual stay in f32 on the VPU.
    h = jnp.dot(wf_ref[...], agg.astype(wf_ref.dtype),
                preferred_element_type=jnp.float32) + b1_ref[...]
    h = jnp.maximum(h, 0.0)
    upd = jnp.dot(w2_ref[...], h.astype(w2_ref.dtype),
                  preferred_element_type=jnp.float32) + b2_ref[...]
    out_ref[...] = (xr_ref[...] + upd).astype(out_ref.dtype)


def _round_up(x, m):
    return -(-x // m) * m


def _pick_row_tile(n_pad, batch, a_itemsize):
    """Largest row tile that is a multiple of 128 dividing n_pad, <= _MAX_ROW_TILE,
    whose double-buffered A_hat^T block fits the VMEM budget; shrunk if it would
    leave fewer than two parallel blocks (v7x has two TensorCores)."""
    units = n_pad // 128
    cands = [128 * d for d in range(1, units + 1)
             if units % d == 0
             and 128 * d <= _MAX_ROW_TILE
             and 2 * n_pad * 128 * d * a_itemsize <= _A_DBLBUF_BUDGET]
    if not cands:
        # TODO(synk): for graphs this large, tile the reduction (source-node)
        # axis as well instead of streaming full-N A_hat^T columns.
        raise NotImplementedError(
            f"padded N={n_pad} too large for single-pass reduction tiling")
    tm = cands[-1]
    while batch * (n_pad // tm) < 2 and len(cands) > 1:
        cands.pop()
        tm = cands[-1]
    return tm


def gcn_normalized_adjacency_t(edge_index, num_nodes, out_dtype=jnp.float32):
    """Dense TRANSPOSED normalized adjacency A_hat^T[src, tgt], matching PyG
    GCNConv defaults (add_remaining_self_loops + symmetric normalization).

    Built directly in the transposed, kernel-streaming layout and dtype so no
    extra O(N^2) transpose / cast pass is needed before the kernel.
    """
    n = num_nodes
    row, col = edge_index[0], edge_index[1]        # row = source, col = target
    not_self = (row != col).astype(jnp.float32)    # drop explicit self loops
    adj_t = jnp.zeros((n, n), jnp.float32).at[row, col].add(not_self)
    adj_t = adj_t + jnp.eye(n, dtype=jnp.float32)  # re-add one self loop / node
    deg = adj_t.sum(axis=0)                        # target degree incl. self loop
    dinv = jax.lax.rsqrt(deg)
    return (dinv[:, None] * adj_t * dinv[None, :]).astype(out_dtype)


def graph_nca_forward_batched(xx, a_hat_t, params, *, agg_dtype=jnp.bfloat16):
    """Fused GCNConv + update-MLP + residual for a batch of graphs.

    xx      : (B, N, C) float32 node features
    a_hat_t : (B, N, N) TRANSPOSED normalized adjacency A_hat^T[src, tgt]
              (ideally already in agg_dtype so no extra cast pass is needed)
    """
    b, n, c = xx.shape
    wg, w1, b1, w2, b2 = params
    hid = w1.shape[1]
    xx = xx.astype(jnp.float32)

    # Exact algebra: A_hat @ (x @ Wg) @ W1 == (A_hat @ x) @ (Wg @ W1).
    wf = wg @ w1                                               # (C, H)

    if n < _MIN_PALLAS_N:
        # Small graphs: per-step overhead + masked 8-of-128-lane stores make a
        # Pallas launch strictly worse than fused XLA.
        agg = jnp.einsum("bst,bsc->btc", a_hat_t.astype(jnp.float32), xx)
        upd = jnp.maximum(agg @ wf + b1, 0.0) @ w2 + b2
        return xx + upd

    wf_t = jnp.transpose(wf).astype(agg_dtype)                 # (H, C)
    w2_t = jnp.transpose(w2).astype(agg_dtype)                 # (C, H)
    b1_t = jnp.reshape(b1, (hid, 1)).astype(jnp.float32)       # (H, 1)
    b2_t = jnp.reshape(b2, (c, 1)).astype(jnp.float32)         # (C, 1)

    # Feature-major (lane-dense over nodes) layout; pad nodes to the row tile.
    n_pad = _round_up(n, 128)
    itemsize = jnp.dtype(agg_dtype).itemsize
    tm = _pick_row_tile(n_pad, b, itemsize)

    x_t = jnp.transpose(xx, (0, 2, 1))                         # (B, C, N) f32
    if n_pad != n:
        x_t = jnp.pad(x_t, ((0, 0), (0, 0), (0, n_pad - n)))
        a_hat_t = jnp.pad(a_hat_t, ((0, 0), (0, n_pad - n), (0, n_pad - n)))
    xk = x_t.astype(agg_dtype)                                 # reduction copy
    # TODO(synk): on v7x, stream a_t as float8_e4m3 (A_hat values lie in (0,1])
    # to halve the dominant HBM bytes, keeping f32 accumulation.
    a_t = a_hat_t.astype(agg_dtype)                            # O(N^2) stream

    grid = (b, n_pad // tm)
    per_step_bytes = (n_pad * tm * itemsize        # A_hat^T tile
                      + c * n_pad * itemsize       # resident x^T (full width)
                      + 2 * c * tm * 4)            # residual + output tiles (f32)
    # Raise the scoped-VMEM limit explicitly (v5e default is 16 MiB); stay well
    # under v7x's 64 MiB physical VMEM.
    vmem_limit = int(min(max(2 * per_step_bytes + (4 << 20), 32 << 20), 56 << 20))

    out_t = pl.pallas_call(
        _gnca_kernel,
        out_shape=jax.ShapeDtypeStruct((b, c, n_pad), jnp.float32),
        grid_spec=pltpu.PrefetchScalarGridSpec(
            num_scalar_prefetch=0,
            grid=grid,
            in_specs=[
                pl.BlockSpec((None, c, n_pad), lambda bb, i: (bb, 0, 0)),   # x^T (agg)
                pl.BlockSpec((None, n_pad, tm), lambda bb, i: (bb, 0, i)),  # A_hat^T
                pl.BlockSpec((None, c, tm), lambda bb, i: (bb, 0, i)),      # x^T (res)
                pl.BlockSpec((hid, c), lambda bb, i: (0, 0)),               # Wf^T
                pl.BlockSpec((hid, 1), lambda bb, i: (0, 0)),               # b1
                pl.BlockSpec((c, hid), lambda bb, i: (0, 0)),               # W2^T
                pl.BlockSpec((c, 1), lambda bb, i: (0, 0)),                 # b2
            ],
            out_specs=pl.BlockSpec((None, c, tm), lambda bb, i: (bb, 0, i)),
        ),
        compiler_params=pltpu.CompilerParams(
            dimension_semantics=("parallel", "parallel"),
            vmem_limit_bytes=vmem_limit,
        ),
    )(xk, a_t, x_t, wf_t, b1_t, w2_t, b2_t)

    return jnp.transpose(out_t[:, :, :n], (0, 2, 1))


def graph_nca_forward(xx, edge_index, parent_index, params,
                      *, agg_dtype=jnp.bfloat16):
    """Single-graph GraphNCA.forward (parent_index is unused by forward)."""
    del parent_index
    n = xx.shape[0]
    stream_dtype = agg_dtype if n >= _MIN_PALLAS_N else jnp.float32
    a_hat_t = gcn_normalized_adjacency_t(edge_index, n, out_dtype=stream_dtype)
    return graph_nca_forward_batched(
        xx[None].astype(jnp.float32), a_hat_t[None], params,
        agg_dtype=agg_dtype)[0]


def init_params(key, num_channels=NUM_CHANNELS, hidden=HIDDEN):
    """Deterministic synthetic parameter init (shapes match the nn.Module)."""
    c = num_channels
    k = jax.random.split(key, 5)
    wg = jax.random.normal(k[0], (c, 3 * c), jnp.float32) * (1.0 / jnp.sqrt(c))
    w1 = jax.random.normal(k[1], (3 * c, hidden), jnp.float32) * (1.0 / jnp.sqrt(3 * c))
    b1 = jax.random.normal(k[2], (1, hidden), jnp.float32) * 0.01
    w2 = jax.random.normal(k[3], (hidden, c), jnp.float32) * (1.0 / jnp.sqrt(hidden))
    b2 = jax.random.normal(k[4], (1, c), jnp.float32) * 0.01
    return (wg, w1, b1, w2, b2)


def reference_forward(xx, edge_index, params):
    """Pure-JAX reference (original, un-fused algebra)."""
    wg, w1, b1, w2, b2 = params
    a_hat_t = gcn_normalized_adjacency_t(edge_index, xx.shape[0], jnp.float32)
    feat = a_hat_t.T @ (xx @ wg)
    upd = jnp.maximum(feat @ w1 + b1, 0.0) @ w2 + b2
    return xx + upd


def _random_undirected_edges(key, num_nodes, num_edges):
    ks, kd = jax.random.split(key)
    s = jax.random.randint(ks, (num_edges,), 0, num_nodes)
    d = jax.random.randint(kd, (num_edges,), 0, num_nodes)
    return jnp.stack([jnp.concatenate([s, d]), jnp.concatenate([d, s])])


if __name__ == "__main__":
    key = jax.random.PRNGKey(0)
    k_x, k_p, k_m, k_me, k_q, k_qe, k_bx, k_be = jax.random.split(key, 8)

    c = NUM_CHANNELS
    params = init_params(k_p)

    # ---- 1) Module-sized single graph (N=8): small-N fused-XLA fallback. ----
    num_nodes = 8
    xx = jax.random.normal(k_x, (num_nodes, c), jnp.float32)
    src = jnp.array([0, 1, 1, 2, 2, 3, 3, 4, 4, 5, 5, 6, 6, 7], dtype=jnp.int32)
    dst = jnp.array([1, 0, 2, 1, 3, 2, 4, 3, 5, 4, 6, 5, 7, 6], dtype=jnp.int32)
    edge_index = jnp.stack([src, dst])
    out_small = jax.block_until_ready(graph_nca_forward(xx, edge_index, 0, params))
    ref_small = reference_forward(xx, edge_index, params)
    assert out_small.shape == (num_nodes, c)
    assert jnp.allclose(out_small, ref_small, atol=1e-3, rtol=1e-3), "small mismatch"

    # ---- 2) Single graph N=384 (Pallas path, tile=128 x 3 row blocks). ----
    n_mid = 384
    xm = jax.random.normal(k_m, (n_mid, c), jnp.float32)
    ei_mid = _random_undirected_edges(k_me, n_mid, 1200)
    ref_mid = reference_forward(xm, ei_mid, params)

    out_f32 = jax.block_until_ready(
        graph_nca_forward(xm, ei_mid, 0, params, agg_dtype=jnp.float32))
    assert out_f32.shape == (n_mid, c)
    assert jnp.allclose(out_f32, ref_mid, atol=2e-2, rtol=2e-2), "f32 mismatch"

    out_bf16 = jax.block_until_ready(graph_nca_forward(xm, ei_mid, 0, params))
    assert jnp.allclose(out_bf16, ref_mid, atol=5e-2, rtol=5e-2), "bf16 mismatch"

    # ---- 3) Single graph N=300 (not a multiple of 128 -> zero-padded). ----
    n_odd = 300
    xq = jax.random.normal(k_q, (n_odd, c), jnp.float32)
    ei_odd = _random_undirected_edges(k_qe, n_odd, 900)
    ref_odd = reference_forward(xq, ei_odd, params)
    out_odd = jax.block_until_ready(graph_nca_forward(xq, ei_odd, 0, params))
    assert out_odd.shape == (n_odd, c)
    assert jnp.allclose(out_odd, ref_odd, atol=5e-2, rtol=5e-2), "padded mismatch"

    # ---- 4) Batched path: B=2 graphs, N=512 (tile=512, 2 parallel blocks). ----
    bsz, n_big, n_edges = 2, 512, 2048
    xb = jax.random.normal(k_bx, (bsz, n_big, c), jnp.float32)
    ek = jax.random.split(k_be, bsz)
    a_t_b = jnp.stack([
        gcn_normalized_adjacency_t(_random_undirected_edges(ek[g], n_big, n_edges),
                                   n_big, out_dtype=jnp.bfloat16)
        for g in range(bsz)
    ])
    out_b = jax.block_until_ready(graph_nca_forward_batched(xb, a_t_b, params))

    def _ref_one(x, a_t):
        wg, w1, b1, w2, b2 = params
        feat = a_t.astype(jnp.float32).T @ (x @ wg)
        upd = jnp.maximum(feat @ w1 + b1, 0.0) @ w2 + b2
        return x + upd

    ref_b = jax.vmap(_ref_one)(xb, a_t_b)
    assert out_b.shape == (bsz, n_big, c)
    assert jnp.allclose(out_b, ref_b, atol=5e-2, rtol=5e-2), "batched mismatch"

    print("KERNEL_OK")
</pallas_src>

<mosaic_0001>
module attributes {stable_mosaic.version = 11 : i64} {
  func.func @_gnca_kernel(%arg0: i32, %arg1: i32, %arg2: memref<1x16x384xf32, #tpu.memory_space<vmem>>, %arg3: memref<1x384x128xf32, #tpu.memory_space<vmem>>, %arg4: memref<1x16x128xf32, #tpu.memory_space<vmem>>, %arg5: memref<32x16xf32, #tpu.memory_space<vmem>>, %arg6: memref<32x1xf32, #tpu.memory_space<vmem>>, %arg7: memref<16x32xf32, #tpu.memory_space<vmem>>, %arg8: memref<16x1xf32, #tpu.memory_space<vmem>>, %arg9: memref<1x16x128xf32, #tpu.memory_space<vmem>>) attributes {dimension_semantics = [#tpu.dimension_semantics<parallel>, #tpu.dimension_semantics<parallel>], iteration_bounds = array<i64: 1, 3>, scalar_prefetch = 0 : i64, scratch_operands = 0 : i64, tpu.core_type = #tpu.core_type<tc>, window_params = [{transform_indices = @transform_0, window_bounds = array<i64: 1, 16, 384>}, {transform_indices = @transform_1, window_bounds = array<i64: 1, 384, 128>}, {transform_indices = @transform_2, window_bounds = array<i64: 1, 16, 128>}, {pipeline_mode = #tpu.pipeline_mode<synchronous>, transform_indices = @transform_3, window_bounds = array<i64: 32, 16>}, {pipeline_mode = #tpu.pipeline_mode<synchronous>, transform_indices = @transform_4, window_bounds = array<i64: 32, 1>}, {pipeline_mode = #tpu.pipeline_mode<synchronous>, transform_indices = @transform_5, window_bounds = array<i64: 16, 32>}, {pipeline_mode = #tpu.pipeline_mode<synchronous>, transform_indices = @transform_6, window_bounds = array<i64: 16, 1>}, {transform_indices = @transform_7, window_bounds = array<i64: 1, 16, 128>}]} {
    %c0 = arith.constant 0 : index
    %c0_0 = arith.constant 0 : index
    %c0_1 = arith.constant 0 : index
    %0 = vector.load %arg2[%c0, %c0_0, %c0_1] : memref<1x16x384xf32, #tpu.memory_space<vmem>>, vector<1x16x384xf32>
    %1 = vector.shape_cast %0 : vector<1x16x384xf32> to vector<16x384xf32>
    %c0_2 = arith.constant 0 : index
    %c0_3 = arith.constant 0 : index
    %c0_4 = arith.constant 0 : index
    %2 = vector.load %arg3[%c0_2, %c0_3, %c0_4] : memref<1x384x128xf32, #tpu.memory_space<vmem>>, vector<1x384x128xf32>
    %3 = vector.shape_cast %2 : vector<1x384x128xf32> to vector<384x128xf32>
    %cst = arith.constant dense<0.000000e+00> : vector<16x128xf32>
    %4 = tpu.matmul %1, %3, %cst {dimension_numbers = #tpu.dot_dimension_numbers<[1], [0], [0], [1], [0, 0, 1, 1], [], []>} : vector<16x384xf32>, vector<384x128xf32>, vector<16x128xf32> -> vector<16x128xf32>
    %c0_5 = arith.constant 0 : index
    %c0_6 = arith.constant 0 : index
    %5 = vector.load %arg5[%c0_5, %c0_6] : memref<32x16xf32, #tpu.memory_space<vmem>>, vector<32x16xf32>
    %cst_7 = arith.constant dense<0.000000e+00> : vector<32x128xf32>
    %6 = tpu.matmul %5, %4, %cst_7 {dimension_numbers = #tpu.dot_dimension_numbers<[1], [0], [0], [1], [0, 0, 1, 1], [], []>} : vector<32x16xf32>, vector<16x128xf32>, vector<32x128xf32> -> vector<32x128xf32>
    %c0_8 = arith.constant 0 : index
    %c0_9 = arith.constant 0 : index
    %7 = vector.load %arg6[%c0_8, %c0_9] : memref<32x1xf32, #tpu.memory_space<vmem>>, vector<32x1xf32>
    %8 = vector.broadcast %7 : vector<32x1xf32> to vector<32x128xf32>
    %9 = arith.addf %6, %8 : vector<32x128xf32>
    %cst_10 = arith.constant 0.000000e+00 : f32
    %10 = vector.broadcast %cst_10 : f32 to vector<32x128xf32>
    %11 = arith.maximumf %9, %10 : vector<32x128xf32>
    %c0_11 = arith.constant 0 : index
    %c0_12 = arith.constant 0 : index
    %12 = vector.load %arg7[%c0_11, %c0_12] : memref<16x32xf32, #tpu.memory_space<vmem>>, vector<16x32xf32>
    %cst_13 = arith.constant dense<0.000000e+00> : vector<16x128xf32>
    %13 = tpu.matmul %12, %11, %cst_13 {dimension_numbers = #tpu.dot_dimension_numbers<[1], [0], [0], [1], [0, 0, 1, 1], [], []>} : vector<16x32xf32>, vector<32x128xf32>, vector<16x128xf32> -> vector<16x128xf32>
    %c0_14 = arith.constant 0 : index
    %c0_15 = arith.constant 0 : index
    %14 = vector.load %arg8[%c0_14, %c0_15] : memref<16x1xf32, #tpu.memory_space<vmem>>, vector<16x1xf32>
    %15 = vector.broadcast %14 : vector<16x1xf32> to vector<16x128xf32>
    %16 = arith.addf %13, %15 : vector<16x128xf32>
    %c0_16 = arith.constant 0 : index
    %c0_17 = arith.constant 0 : index
    %c0_18 = arith.constant 0 : index
    %17 = vector.load %arg4[%c0_16, %c0_17, %c0_18] : memref<1x16x128xf32, #tpu.memory_space<vmem>>, vector<1x16x128xf32>
    %18 = vector.shape_cast %17 : vector<1x16x128xf32> to vector<16x128xf32>
    %19 = arith.addf %18, %16 : vector<16x128xf32>
    %c0_19 = arith.constant 0 : index
    %c0_20 = arith.constant 0 : index
    %c0_21 = arith.constant 0 : index
    %20 = vector.load %arg9[%c0_19, %c0_20, %c0_21] : memref<1x16x128xf32, #tpu.memory_space<vmem>>, vector<1x16x128xf32>
    %21 = vector.shape_cast %20 : vector<1x16x128xf32> to vector<16x128xf32>
    %22 = vector.shape_cast %19 : vector<16x128xf32> to vector<1x16x128xf32>
    tpu.vector_store %arg9[%c0_19, %c0_20, %c0_21], %22 {strides = array<i32>} : memref<1x16x128xf32, #tpu.memory_space<vmem>>, vector<1x16x128xf32>,
    return
  }
  func.func @transform_0(%arg0: i32, %arg1: i32) -> (i32, i32, i32) {
    %c0_i32 = arith.constant 0 : i32
    %c0_i32_0 = arith.constant 0 : i32
    %c0_i32_1 = arith.constant 0 : i32
    return %arg0, %c0_i32, %c0_i32_0 : i32, i32, i32
  }
  func.func @transform_1(%arg0: i32, %arg1: i32) -> (i32, i32, i32) {
    %c0_i32 = arith.constant 0 : i32
    %c0_i32_0 = arith.constant 0 : i32
    return %arg0, %c0_i32, %arg1 : i32, i32, i32
  }
  func.func @transform_2(%arg0: i32, %arg1: i32) -> (i32, i32, i32) {
    %c0_i32 = arith.constant 0 : i32
    %c0_i32_0 = arith.constant 0 : i32
    return %arg0, %c0_i32, %arg1 : i32, i32, i32
  }
  func.func @transform_3(%arg0: i32, %arg1: i32) -> (i32, i32) {
    %c0_i32 = arith.constant 0 : i32
    %c0_i32_0 = arith.constant 0 : i32
    %c0_i32_1 = arith.constant 0 : i32
    return %c0_i32, %c0_i32_0 : i32, i32
  }
  func.func @transform_4(%arg0: i32, %arg1: i32) -> (i32, i32) {
    %c0_i32 = arith.constant 0 : i32
    %c0_i32_0 = arith.constant 0 : i32
    %c0_i32_1 = arith.constant 0 : i32
    return %c0_i32, %c0_i32_0 : i32, i32
  }
  func.func @transform_5(%arg0: i32, %arg1: i32) -> (i32, i32) {
    %c0_i32 = arith.constant 0 : i32
    %c0_i32_0 = arith.constant 0 : i32
    %c0_i32_1 = arith.constant 0 : i32
    return %c0_i32, %c0_i32_0 : i32, i32
  }
  func.func @transform_6(%arg0: i32, %arg1: i32) -> (i32, i32) {
    %c0_i32 = arith.constant 0 : i32
    %c0_i32_0 = arith.constant 0 : i32
    %c0_i32_1 = arith.constant 0 : i32
    return %c0_i32, %c0_i32_0 : i32, i32
  }
  func.func @transform_7(%arg0: i32, %arg1: i32) -> (i32, i32, i32) {
    %c0_i32 = arith.constant 0 : i32
    %c0_i32_0 = arith.constant 0 : i32
    return %arg0, %c0_i32, %arg1 : i32, i32, i32
  }
}

</mosaic_0001>

<llo_original>
// kernel: tpu_custom_call.1
$region0: #{tpu_custom_call.1}
  #allocation0 [shape = 'u32[]', space=smem, size = 0x4, offset = 0x4, fixed_abs, tag = 'smem constant byte address 0x4 - core index']
  #allocation1 [shape = 'u32[72,128]{1,0:T(1,128)}', space=vmem, size = 0x9000, scoped, tag = 'internal scratch']
  %s0 = inlined_call_operand.vmem [shape: f32[1,16,384], index: 0, kind: input, shape index: {}]
  %s1 = inlined_call_operand.hbm [shape: f32[1,384,384], index: 1, kind: input, shape index: {}]
  %s2 = inlined_call_operand.hbm [shape: f32[1,16,384], index: 2, kind: input, shape index: {}]
  %s3 = inlined_call_operand.vmem [shape: f32[32,16], index: 3, kind: input, shape index: {}]
  %s4 = inlined_call_operand.vmem [shape: f32[32,1], index: 4, kind: input, shape index: {}]
  %s5 = inlined_call_operand.vmem [shape: f32[16,32], index: 5, kind: input, shape index: {}]
  %s6 = inlined_call_operand.vmem [shape: f32[16,1], index: 6, kind: input, shape index: {}]
  %s7 = inlined_call_operand.hbm [shape: f32[1,16,384], index: 7, kind: output, shape index: {}]
  %s8 = sld [smem:[#allocation0]]
  $region69: #{tpu_custom_call.1} parent=0
    _
  %s10 = ssub.s32 1, %s8
  %s11 = scalar_select 0, %s10, %s8
  $region1: #{tpu_custom_call.1} parent=0
    #allocation2 [shape = 'u8[393216]{0}', space=vmem, size = 0x60000, scoped, tag = 'input window, operand 1']
    #allocation3 [shape = 's32[2]{0}', space=sflag, size = 0x8, scoped, tag = 'scoped memory for tpu_custom_call.1']
    #allocation4 [shape = 's32[2]{0}', space=sflag, size = 0x8, scoped, tag = 'scoped memory for tpu_custom_call.1']
    #allocation5 [shape = 'u8[16384]{0}', space=vmem, size = 0x4000, scoped, tag = 'input window, operand 2']
    #allocation6 [shape = 's32[2]{0}', space=sflag, size = 0x8, scoped, tag = 'scoped memory for tpu_custom_call.1']
    #allocation7 [shape = 'u8[16384]{0}', space=vmem, size = 0x4000, scoped, tag = 'output window, operand 0']
    %12 = vsyncpa [#allocation3], 0
    %s13 = scalar_lea.sflag [#allocation3], 1
    %14 = vsyncpa %s13, 0
    %15 = vsyncpa [#allocation6], 0
    %s16 = scalar_lea.sflag [#allocation6], 1
    %17 = vsyncpa %s16, 0
    %18 = vsyncpa [#allocation4], 0
    %s19 = scalar_lea.sflag [#allocation4], 1
    %20 = vsyncpa %s19, 0
    loop: start=0, step=1, limit=5
    $region2: #{tpu_custom_call.1} parent=1 // loop_pre_header
      _
    $region3: #{tpu_custom_call.1} parent=1 // loop_header
      %s22 = sphi 0, %s26
      %p23 = scmp.ge.s32.totalorder %s22, 5
      %s29 = sphi 0, %s41
      %s30 = sphi 0, %s37
      %s31 = sphi 0, %s29
      %s32 = sphi 0, %s30
      %s33 = sphi 0, %s31
      %s34 = sphi 0, %s32
      %s44 = sphi 0, %s46
      %s47 = sphi 0, %s44
      %s48 = sphi 0, %s47
      %s64 = sphi 0, %s48
      %s72 = sphi 0, %s74
      %s75 = sphi 0, %s72
      %s76 = sphi 0, %s75
      %s92 = sphi 0, %s76
      %s100 = sphi 0, %s102
      %s103 = sphi 0, %s100
      %s104 = sphi 0, %s103
      %s120 = sphi 0, %s104
      %s124 = sphi 0, %s124
      %s126 = sphi 0, %s124
      %s127 = sphi 0, %s126
      %s141 = sphi 0, %s127
      %s145 = sphi 0, %s145
      %s147 = sphi 0, %s145
      %s148 = sphi 0, %s147
      %s162 = sphi 0, %s148
      %s166 = sphi 0, %s166
      %s168 = sphi 0, %s166
      %s169 = sphi 0, %s168
      %s183 = sphi 0, %s169
      %s187 = sphi 0, %s187
      %s189 = sphi 0, %s187
      %s190 = sphi 0, %s189
      %s204 = sphi 0, %s190
      %s212 = sphi 0, %s214
      %s215 = sphi 0, %s212
      %s216 = sphi 0, %s215
      %s232 = sphi 0, %s216
    $region4: #{tpu_custom_call.1} parent=1 // loop_header_branch
      %25 = sbr.rel (%p23) target = $region8
    $region5: #{tpu_custom_call.1} parent=1 // loop_body
      %s27 = ssub.s32 %s22, 1
      %s28 = ssub.s32 %s22, 2
      %s35 = sadd.s32 1, %s30
      %p36 = scmp.ge.s32.totalorder %s35, 3
      %s37 = scalar_select %p36, 0, %s35
      %s38 = sadd.s32 1, %s29
      %s39 = scalar_select %p36, %s38, %s29
      %p40 = scmp.ge.s32.totalorder %s39, 1
      %s41 = scalar_select %p40, 0, %s39
      %s42 = ssub.s32 %s29, %s41
      %p43 = scmp.eq.s32.totalorder %s42, 0
      %s45 = sadd.s32 %s44, 1
      %s46 = scalar_select %p43, %s44, %s45
      %p49 = pneg %p43
      %p50 = scmp.eq.s32.totalorder %s22, 2
      %p51 = por %p49, %p50
      %p52 = scmp.ne.s32.totalorder %s44, %s47
      %p53 = scmp.eq.s32.totalorder %s22, 0
      %p54 = por %p52, %p53
      %p55 = scmp.ne.s32.totalorder %s44, %s47
      %p56 = scmp.eq.s32.totalorder %s27, 2
      %p57 = por %p55, %p56
      %p58 = scmp.ne.s32.totalorder %s47, %s48
      %p59 = scmp.eq.s32.totalorder %s27, 0
      %p60 = por %p58, %p59
      %p61 = scmp.ne.s32.totalorder %s47, %s48
      %p62 = scmp.eq.s32.totalorder %s28, 2
      %p63 = por %p61, %p62
      %p65 = scmp.ne.s32.totalorder %s48, %s64
      %p66 = scmp.eq.s32.totalorder %s28, 0
      %p67 = por %p65, %p66
      %s68 = ssub.s32 %s29, %s41
      %s69 = ssub.s32 %s30, %s37
      %s70 = sor.u32 %s68, %s69
      %p71 = scmp.eq.s32.totalorder %s70, 0
      %s73 = sadd.s32 %s72, 1
      %s74 = scalar_select %p71, %s72, %s73
      %p77 = pneg %p71
      %p78 = scmp.eq.s32.totalorder %s22, 2
      %p79 = por %p77, %p78
      %p80 = scmp.ne.s32.totalorder %s72, %s75
      %p81 = scmp.eq.s32.totalorder %s22, 0
      %p82 = por %p80, %p81
      %p83 = scmp.ne.s32.totalorder %s72, %s75
      %p84 = scmp.eq.s32.totalorder %s27, 2
      %p85 = por %p83, %p84
      %p86 = scmp.ne.s32.totalorder %s75, %s76
      %p87 = scmp.eq.s32.totalorder %s27, 0
      %p88 = por %p86, %p87
      %p89 = scmp.ne.s32.totalorder %s75, %s76
      %p90 = scmp.eq.s32.totalorder %s28, 2
      %p91 = por %p89, %p90
      %p93 = scmp.ne.s32.totalorder %s76, %s92
      %p94 = scmp.eq.s32.totalorder %s28, 0
      %p95 = por %p93, %p94
      %s96 = ssub.s32 %s29, %s41
      %s97 = ssub.s32 %s30, %s37
      %s98 = sor.u32 %s96, %s97
      %p99 = scmp.eq.s32.totalorder %s98, 0
      %s101 = sadd.s32 %s100, 1
      %s102 = scalar_select %p99, %s100, %s101
      %p105 = pneg %p99
      %p106 = scmp.eq.s32.totalorder %s22, 2
      %p107 = por %p105, %p106
      %p108 = scmp.ne.s32.totalorder %s100, %s103
      %p109 = scmp.eq.s32.totalorder %s22, 0
      %p110 = por %p108, %p109
      %p111 = scmp.ne.s32.totalorder %s100, %s103
      %p112 = scmp.eq.s32.totalorder %s27, 2
      %p113 = por %p111, %p112
      %p114 = scmp.ne.s32.totalorder %s103, %s104
      %p115 = scmp.eq.s32.totalorder %s27, 0
      %p116 = por %p114, %p115
      %p117 = scmp.ne.s32.totalorder %s103, %s104
      %p118 = scmp.eq.s32.totalorder %s28, 2
      %p119 = por %p117, %p118
      %p121 = scmp.ne.s32.totalorder %s104, %s120
      %p122 = scmp.eq.s32.totalorder %s28, 0
      %p123 = por %p121, %p122
      %s125 = sadd.s32 %s124, 1
      %p128 = scmp.eq.s32.totalorder %s22, 2
      %p129 = scmp.ne.s32.totalorder %s124, %s126
      %p130 = scmp.eq.s32.totalorder %s22, 0
      %p131 = por %p129, %p130
      %p132 = scmp.ne.s32.totalorder %s124, %s126
      %p133 = scmp.eq.s32.totalorder %s27, 2
      %p134 = por %p132, %p133
      %p135 = scmp.ne.s32.totalorder %s126, %s127
      %p136 = scmp.eq.s32.totalorder %s27, 0
      %p137 = por %p135, %p136
      %p138 = scmp.ne.s32.totalorder %s126, %s127
      %p139 = scmp.eq.s32.totalorder %s28, 2
      %p140 = por %p138, %p139
      %p142 = scmp.ne.s32.totalorder %s127, %s141
      %p143 = scmp.eq.s32.totalorder %s28, 0
      %p144 = por %p142, %p143
      %s146 = sadd.s32 %s145, 1
      %p149 = scmp.eq.s32.totalorder %s22, 2
      %p150 = scmp.ne.s32.totalorder %s145, %s147
      %p151 = scmp.eq.s32.totalorder %s22, 0
      %p152 = por %p150, %p151
      %p153 = scmp.ne.s32.totalorder %s145, %s147
      %p154 = scmp.eq.s32.totalorder %s27, 2
      %p155 = por %p153, %p154
      %p156 = scmp.ne.s32.totalorder %s147, %s148
      %p157 = scmp.eq.s32.totalorder %s27, 0
      %p158 = por %p156, %p157
      %p159 = scmp.ne.s32.totalorder %s147, %s148
      %p160 = scmp.eq.s32.totalorder %s28, 2
      %p161 = por %p159, %p160
      %p163 = scmp.ne.s32.totalorder %s148, %s162
      %p164 = scmp.eq.s32.totalorder %s28, 0
      %p165 = por %p163, %p164
      %s167 = sadd.s32 %s166, 1
      %p170 = scmp.eq.s32.totalorder %s22, 2
      %p171 = scmp.ne.s32.totalorder %s166, %s168
      %p172 = scmp.eq.s32.totalorder %s22, 0
      %p173 = por %p171, %p172
      %p174 = scmp.ne.s32.totalorder %s166, %s168
      %p175 = scmp.eq.s32.totalorder %s27, 2
      %p176 = por %p174, %p175
      %p177 = scmp.ne.s32.totalorder %s168, %s169
      %p178 = scmp.eq.s32.totalorder %s27, 0
      %p179 = por %p177, %p178
      %p180 = scmp.ne.s32.totalorder %s168, %s169
      %p181 = scmp.eq.s32.totalorder %s28, 2
      %p182 = por %p180, %p181
      %p184 = scmp.ne.s32.totalorder %s169, %s183
      %p185 = scmp.eq.s32.totalorder %s28, 0
      %p186 = por %p184, %p185
      %s188 = sadd.s32 %s187, 1
      %p191 = scmp.eq.s32.totalorder %s22, 2
      %p192 = scmp.ne.s32.totalorder %s187, %s189
      %p193 = scmp.eq.s32.totalorder %s22, 0
      %p194 = por %p192, %p193
      %p195 = scmp.ne.s32.totalorder %s187, %s189
      %p196 = scmp.eq.s32.totalorder %s27, 2
      %p197 = por %p195, %p196
      %p198 = scmp.ne.s32.totalorder %s189, %s190
      %p199 = scmp.eq.s32.totalorder %s27, 0
      %p200 = por %p198, %p199
      %p201 = scmp.ne.s32.totalorder %s189, %s190
      %p202 = scmp.eq.s32.totalorder %s28, 2
      %p203 = por %p201, %p202
      %p205 = scmp.ne.s32.totalorder %s190, %s204
      %p206 = scmp.eq.s32.totalorder %s28, 0
      %p207 = por %p205, %p206
      %s208 = ssub.s32 %s29, %s41
      %s209 = ssub.s32 %s30, %s37
      %s210 = sor.u32 %s208, %s209
      %p211 = scmp.eq.s32.totalorder %s210, 0
      %s213 = sadd.s32 %s212, 1
      %s214 = scalar_select %p211, %s212, %s213
      %p217 = pneg %p211
      %p218 = scmp.eq.s32.totalorder %s22, 2
      %p219 = por %p217, %p218
      %p220 = scmp.ne.s32.totalorder %s212, %s215
      %p221 = scmp.eq.s32.totalorder %s22, 0
      %p222 = por %p220, %p221
      %p223 = scmp.ne.s32.totalorder %s212, %s215
      %p224 = scmp.eq.s32.totalorder %s27, 2
      %p225 = por %p223, %p224
      %p226 = scmp.ne.s32.totalorder %s215, %s216
      %p227 = scmp.eq.s32.totalorder %s27, 0
      %p228 = por %p226, %p227
      %p229 = scmp.ne.s32.totalorder %s215, %s216
      %p230 = scmp.eq.s32.totalorder %s28, 2
      %p231 = por %p229, %p230
      %p233 = scmp.ne.s32.totalorder %s216, %s232
      %p234 = scmp.eq.s32.totalorder %s28, 0
      %p235 = por %p233, %p234
      %p236 = scmp.le.s32.totalorder 1, %s22
      %p237 = scmp.lt.s32.totalorder %s22, 4
      %p238 = pnand %p236, %p237
      %p239 = pneg %p238
      // Predicated region
      $region9: #{tpu_custom_call.1} parent=5 // pred_check
        _
      $region10: #{tpu_custom_call.1} parent=5 // pred_check_branch
        %241 = sbr.rel (%p238) target = $region12
      $region11: #{tpu_custom_call.1} parent=5 // pred_region
        %s242 = ssub.s32 %s22, 1
        // Predicated region
        $region13: #{tpu_custom_call.1} parent=11 // pred_check
          %p243 = pneg %p60
        $region14: #{tpu_custom_call.1} parent=11 // pred_check_branch
          %245 = sbr.rel (%p243) target = $region16
        $region15: #{tpu_custom_call.1} parent=11 // pred_region
          %p246 = scmp.lt.s32.totalorder %s31, 0
          %s247 = scalar_select %p246, %s31, 0
          %s248 = smul.addr %s247, 6
          %s249 = smul.addr %s248, 8
          %s250 = scalar_lea.vmem %s0, %s249
        $region16: #{tpu_custom_call.1} parent=11 // pred_fallthru
          _
        // Predicated region
        $region17: #{tpu_custom_call.1} parent=11 // pred_check
          %p251 = pneg %p137
        $region18: #{tpu_custom_call.1} parent=11 // pred_check_branch
          %253 = sbr.rel (%p251) target = $region20
        $region19: #{tpu_custom_call.1} parent=11 // pred_region
          _
        $region20: #{tpu_custom_call.1} parent=11 // pred_fallthru
          _
        // Predicated region
        $region21: #{tpu_custom_call.1} parent=11 // pred_check
          %p254 = pneg %p158
        $region22: #{tpu_custom_call.1} parent=11 // pred_check_branch
          %256 = sbr.rel (%p254) target = $region24
        $region23: #{tpu_custom_call.1} parent=11 // pred_region
          _
        $region24: #{tpu_custom_call.1} parent=11 // pred_fallthru
          _
        // Predicated region
        $region25: #{tpu_custom_call.1} parent=11 // pred_check
          %p257 = pneg %p179
        $region26: #{tpu_custom_call.1} parent=11 // pred_check_branch
          %259 = sbr.rel (%p257) target = $region28
        $region27: #{tpu_custom_call.1} parent=11 // pred_region
          _
        $region28: #{tpu_custom_call.1} parent=11 // pred_fallthru
          _
        // Predicated region
        $region29: #{tpu_custom_call.1} parent=11 // pred_check
          %p260 = pneg %p200
        $region30: #{tpu_custom_call.1} parent=11 // pred_check_branch
          %262 = sbr.rel (%p260) target = $region32
        $region31: #{tpu_custom_call.1} parent=11 // pred_region
          _
        $region32: #{tpu_custom_call.1} parent=11 // pred_fallthru
          _
      $region12: #{tpu_custom_call.1} parent=5 // pred_fallthru
        _
      %p263 = scmp.lt.s32.totalorder %s22, 3
      // Predicated region
      $region33: #{tpu_custom_call.1} parent=5 // pred_check
        %p264 = pneg %p263
      $region34: #{tpu_custom_call.1} parent=5 // pred_check_branch
        %266 = sbr.rel (%p264) target = $region36
      $region35: #{tpu_custom_call.1} parent=5 // pred_region
        // Predicated region
        $region37: #{tpu_custom_call.1} parent=35 // pred_check
          %p267 = pneg %p82
        $region38: #{tpu_custom_call.1} parent=35 // pred_check_branch
          %269 = sbr.rel (%p267) target = $region40
        $region39: #{tpu_custom_call.1} parent=35 // pred_region
          %s270 = sand.u32 %s72, 1
          %s271 = scalar_lea.sflag [#allocation3], %s270
          %s272 = sand.u32 %s72, 1
          %s273 = smul.addr %s272, 384
          %s274 = scalar_lea.vmem [#allocation2], %s273
          %276 = vsyncadd %s271, 0
          %s277 = smul.addr %s29, 144
          %s278 = sadd.s32 %s30, %s277
          %s279 = smul.addr %s278, 8
          %s280 = scalar_lea.hbm %s1, %s279
          %s281 = sshll.u32 %s280, 4
          %s282 = int_to_ptr.hbm [resolvable:$true] %s281
          %s283 = sshll.u32 %s274, 4
          %s284 = int_to_ptr.vmem [resolvable:$true] %s283
          %289 = dma.hbm_to_vmem [thread:$0]  %s282, 6144, %s284, %s271, 384, 128, 8
        $region40: #{tpu_custom_call.1} parent=35 // pred_fallthru
          _
        // Predicated region
        $region41: #{tpu_custom_call.1} parent=35 // pred_check
          %p290 = pneg %p110
        $region42: #{tpu_custom_call.1} parent=35 // pred_check_branch
          %292 = sbr.rel (%p290) target = $region44
        $region43: #{tpu_custom_call.1} parent=35 // pred_region
          %s293 = sand.u32 %s100, 1
          %s294 = scalar_lea.sflag [#allocation6], %s293
          %s295 = sand.u32 %s100, 1
          %s296 = smul.addr %s295, 16
          %s297 = scalar_lea.vmem [#allocation5], %s296
          %299 = vsyncadd %s294, 0
          %s300 = smul.addr %s29, 6
          %s301 = sadd.s32 %s30, %s300
          %s302 = smul.addr %s301, 8
          %s303 = scalar_lea.hbm %s2, %s302
          %s304 = sshll.u32 %s303, 4
          %s305 = int_to_ptr.hbm [resolvable:$true] %s304
          %s306 = sshll.u32 %s297, 4
          %s307 = int_to_ptr.vmem [resolvable:$true] %s306
          %312 = dma.hbm_to_vmem [thread:$0]  %s305, 256, %s307, %s294, 384, 128, 8
        $region44: #{tpu_custom_call.1} parent=35 // pred_fallthru
          _
      $region36: #{tpu_custom_call.1} parent=5 // pred_fallthru
        _
      %p313 = scmp.le.s32.totalorder 1, %s22
      %p314 = scmp.lt.s32.totalorder %s22, 4
      %p315 = pnand %p313, %p314
      %p316 = pneg %p315
      // Predicated region
      $region45: #{tpu_custom_call.1} parent=5 // pred_check
        _
      $region46: #{tpu_custom_call.1} parent=5 // pred_check_branch
        %318 = sbr.rel (%p315) target = $region48
      $region47: #{tpu_custom_call.1} parent=5 // pred_region
        %s319 = ssub.s32 %s22, 1
        %s320 = sand.u32 %s75, 1
        %s321 = scalar_lea.sflag [#allocation3], %s320
        %s322 = sand.u32 %s75, 1
        %s323 = smul.addr %s322, 384
        %s324 = scalar_lea.vmem [#allocation2], %s323
        // Predicated region
        $region49: #{tpu_custom_call.1} parent=47 // pred_check
          %p325 = pneg %p88
        $region50: #{tpu_custom_call.1} parent=47 // pred_check_branch
          %327 = sbr.rel (%p325) target = $region52
        $region51: #{tpu_custom_call.1} parent=47 // pred_region
          %329 = dma.done %s321, 6144
        $region52: #{tpu_custom_call.1} parent=47 // pred_fallthru
          _
        %s330 = sand.u32 %s103, 1
        %s331 = scalar_lea.sflag [#allocation6], %s330
        %s332 = sand.u32 %s103, 1
        %s333 = smul.addr %s332, 16
        %s334 = scalar_lea.vmem [#allocation5], %s333
        // Predicated region
        $region53: #{tpu_custom_call.1} parent=47 // pred_check
          %p335 = pneg %p116
        $region54: #{tpu_custom_call.1} parent=47 // pred_check_branch
          %337 = sbr.rel (%p335) target = $region56
        $region55: #{tpu_custom_call.1} parent=47 // pred_region
          %339 = dma.done %s331, 256
        $region56: #{tpu_custom_call.1} parent=47 // pred_fallthru
          _
        %p340 = scmp.lt.s32.totalorder %s31, 0
        %s341 = scalar_select %p340, %s31, 0
        %s342 = smul.addr %s341, 6
        %s343 = smul.addr %s342, 8
        %s344 = scalar_lea.vmem %s0, %s343
        %p345 = pneg %p60
        %p346 = pneg %p57
        %s347 = sand.u32 %s75, 1
        %s348 = scalar_lea.sflag [#allocation3], %s347
        %s349 = sand.u32 %s75, 1
        %s350 = smul.addr %s349, 384
        %s351 = scalar_lea.vmem [#allocation2], %s350
        %p352 = pneg %p88
        %p353 = pneg %p85
        %s354 = sand.u32 %s103, 1
        %s355 = scalar_lea.sflag [#allocation6], %s354
        %s356 = sand.u32 %s103, 1
        %s357 = smul.addr %s356, 16
        %s358 = scalar_lea.vmem [#allocation5], %s357
        %p359 = pneg %p116
        %p360 = pneg %p113
        %p361 = pneg %p137
        %p362 = pneg %p134
        %p363 = pneg %p158
        %p364 = pneg %p155
        %p365 = pneg %p179
        %p366 = pneg %p176
        %p367 = pneg %p200
        %p368 = pneg %p197
        %p369 = pneg %p228
        %p370 = pneg %p225
        %s371 = sand.u32 %s215, 1
        %s372 = scalar_lea.sflag [#allocation4], %s371
        %s373 = sand.u32 %s215, 1
        %s374 = smul.addr %s373, 16
        %s375 = scalar_lea.vmem [#allocation7], %s374
        %p376 = scmp.lt.s32.totalorder %s31, 0
        %s377 = scalar_select %p376, %s31, 0
        %s378 = smul.addr %s377, 6
        %s379 = smul.addr %s378, 8
        %s380 = scalar_lea.vmem %s0, %s379
        %v381 = vld [vmem:[%s380] sm:$0xff]
        %v382 = vld [vmem:[%s380 + $0x8] sm:$0xff]
        %v383 = vld [vmem:[%s380 + $0x10] sm:$0xff]
        %v384 = vld [vmem:[%s380 + $0x18] sm:$0xff]
        %v385 = vld [vmem:[%s380 + $0x20] sm:$0xff]
        %v386 = vld [vmem:[%s380 + $0x28] sm:$0xff]
        %v387 = vld [vmem:[%s324] sm:$0xff]
        %v388 = vld [vmem:[%s324 + $0x8] sm:$0xff]
        %v389 = vld [vmem:[%s324 + $0x10] sm:$0xff]
        %v390 = vld [vmem:[%s324 + $0x18] sm:$0xff]
        %v391 = vld [vmem:[%s324 + $0x20] sm:$0xff]
        %v392 = vld [vmem:[%s324 + $0x28] sm:$0xff]
        %v393 = vld [vmem:[%s324 + $0x30] sm:$0xff]
        %v394 = vld [vmem:[%s324 + $0x38] sm:$0xff]
        %v395 = vld [vmem:[%s324 + $0x40] sm:$0xff]
        %v396 = vld [vmem:[%s324 + $0x48] sm:$0xff]
        %v397 = vld [vmem:[%s324 + $0x50] sm:$0xff]
        %v398 = vld [vmem:[%s324 + $0x58] sm:$0xff]
        %v399 = vld [vmem:[%s324 + $0x60] sm:$0xff]
        %v400 = vld [vmem:[%s324 + $0x68] sm:$0xff]
        %v401 = vld [vmem:[%s324 + $0x70] sm:$0xff]
        %v402 = vld [vmem:[%s324 + $0x78] sm:$0xff]
        %v403 = vld [vmem:[%s324 + $0x80] sm:$0xff]
        %v404 = vld [vmem:[%s324 + $0x88] sm:$0xff]
        %v405 = vld [vmem:[%s324 + $0x90] sm:$0xff]
        %v406 = vld [vmem:[%s324 + $0x98] sm:$0xff]
        %v407 = vld [vmem:[%s324 + $0xa0] sm:$0xff]
        %v408 = vld [vmem:[%s324 + $0xa8] sm:$0xff]
        %v409 = vld [vmem:[%s324 + $0xb0] sm:$0xff]
        %v410 = vld [vmem:[%s324 + $0xb8] sm:$0xff]
        %v411 = vld [vmem:[%s324 + $0xc0] sm:$0xff]
        %v412 = vld [vmem:[%s324 + $0xc8] sm:$0xff]
        %v413 = vld [vmem:[%s324 + $0xd0] sm:$0xff]
        %v414 = vld [vmem:[%s324 + $0xd8] sm:$0xff]
        %v415 = vld [vmem:[%s324 + $0xe0] sm:$0xff]
        %v416 = vld [vmem:[%s324 + $0xe8] sm:$0xff]
        %v417 = vld [vmem:[%s324 + $0xf0] sm:$0xff]
        %v418 = vld [vmem:[%s324 + $0xf8] sm:$0xff]
        %v419 = vld [vmem:[%s324 + $0x100] sm:$0xff]
        %v420 = vld [vmem:[%s324 + $0x108] sm:$0xff]
        %v421 = vld [vmem:[%s324 + $0x110] sm:$0xff]
        %v422 = vld [vmem:[%s324 + $0x118] sm:$0xff]
        %v423 = vld [vmem:[%s324 + $0x120] sm:$0xff]
        %v424 = vld [vmem:[%s324 + $0x128] sm:$0xff]
        %v425 = vld [vmem:[%s324 + $0x130] sm:$0xff]
        %v426 = vld [vmem:[%s324 + $0x138] sm:$0xff]
        %v427 = vld [vmem:[%s324 + $0x140] sm:$0xff]
        %v428 = vld [vmem:[%s324 + $0x148] sm:$0xff]
        %v429 = vld [vmem:[%s324 + $0x150] sm:$0xff]
        %v430 = vld [vmem:[%s324 + $0x158] sm:$0xff]
        %v431 = vld [vmem:[%s324 + $0x160] sm:$0xff]
        %v432 = vld [vmem:[%s324 + $0x168] sm:$0xff]
        %v433 = vld [vmem:[%s324 + $0x170] sm:$0xff]
        %v434 = vld [vmem:[%s324 + $0x178] sm:$0xff]
        %435 = vmatpush.msra.mxu0 %v402
        %436 = vmatpush.msra.mxu0 %v401
        %437 = vmatpush.msra.mxu0 %v400
        %438 = vmatpush.msra.mxu0 %v399
        %439 = vmatpush.msra.mxu0 %v398
        %440 = vmatpush.msra.mxu0 %v397
        %441 = vmatpush.msra.mxu0 %v396
        %442 = vmatpush.msra.mxu0 %v395
        %443 = vmatpush.msra.mxu0 %v394
        %444 = vmatpush.msra.mxu0 %v393
        %445 = vmatpush.msra.mxu0 %v392
        %446 = vmatpush.msra.mxu0 %v391
        %447 = vmatpush.msra.mxu0 %v390
        %448 = vmatpush.msra.mxu0 %v389
        %449 = vmatpush.msra.mxu0 %v388
        %450 = vmatpush.msra.mxu0 %v387
        %451 = vmatmul.f32.gmra.mxu0 %v381
        %v452 = vpop.f32.mrf.mxu0
        %v453 = vadd.f32 0.0, %v452
        %454 = vmatmul.f32.gmra.mxu0 %v384
        %v455 = vpop.f32.mrf.mxu0
        %v456 = vadd.f32 0.0, %v455
        %457 = vdwg.mxu0
        %458 = vmatpush.msra.mxu0 %v418
        %459 = vmatpush.msra.mxu0 %v417
        %460 = vmatpush.msra.mxu0 %v416
        %461 = vmatpush.msra.mxu0 %v415
        %462 = vmatpush.msra.mxu0 %v414
        %463 = vmatpush.msra.mxu0 %v413
        %464 = vmatpush.msra.mxu0 %v412
        %465 = vmatpush.msra.mxu0 %v411
        %466 = vmatpush.msra.mxu0 %v410
        %467 = vmatpush.msra.mxu0 %v409
        %468 = vmatpush.msra.mxu0 %v408
        %469 = vmatpush.msra.mxu0 %v407
        %470 = vmatpush.msra.mxu0 %v406
        %471 = vmatpush.msra.mxu0 %v405
        %472 = vmatpush.msra.mxu0 %v404
        %473 = vmatpush.msra.mxu0 %v403
        %474 = vmatmul.f32.gmra.mxu0 %v382
        %v475 = vpop.f32.mrf.mxu0
        %v476 = vadd.f32 %v453, %v475
        %477 = vmatmul.f32.gmra.mxu0 %v385
        %v478 = vpop.f32.mrf.mxu0
        %v479 = vadd.f32 %v456, %v478
        %480 = vdwg.mxu0
        %481 = vmatpush.msra.mxu0 %v434
        %482 = vmatpush.msra.mxu0 %v433
        %483 = vmatpush.msra.mxu0 %v432
        %484 = vmatpush.msra.mxu0 %v431
        %485 = vmatpush.msra.mxu0 %v430
        %486 = vmatpush.msra.mxu0 %v429
        %487 = vmatpush.msra.mxu0 %v428
        %488 = vmatpush.msra.mxu0 %v427
        %489 = vmatpush.msra.mxu0 %v426
        %490 = vmatpush.msra.mxu0 %v425
        %491 = vmatpush.msra.mxu0 %v424
        %492 = vmatpush.msra.mxu0 %v423
        %493 = vmatpush.msra.mxu0 %v422
        %494 = vmatpush.msra.mxu0 %v421
        %495 = vmatpush.msra.mxu0 %v420
        %496 = vmatpush.msra.mxu0 %v419
        %497 = vmatmul.f32.gmra.mxu0 %v383
        %v498 = vpop.f32.mrf.mxu0
        %v499 = vadd.f32 %v476, %v498
        %500 = vmatmul.f32.gmra.mxu0 %v386
        %v501 = vpop.f32.mrf.mxu0
        %v502 = vadd.f32 %v479, %v501
        %503 = vdwg.mxu0
        %v504 = vld [vmem:[%s3] sm:$0xff]
        %v505 = vld [vmem:[%s3 + $0x8] sm:$0xff]
        %v506 = vld [vmem:[%s3 + $0x10] sm:$0xff]
        %v507 = vld [vmem:[%s3 + $0x18] sm:$0xff]
        %v508 = vld [vmem:[%s4] sm:$0xff]
        %v509 = vld [vmem:[%s4 + $0x8] sm:$0xff]
        %v510 = vld [vmem:[%s4 + $0x10] sm:$0xff]
        %v511 = vld [vmem:[%s4 + $0x18] sm:$0xff]
        %513 = vset.pattern.permute.xlu0 0
        %514 = vperm.xlu0 %513, %v508
        %v515 = vpop.permute.xlu0 %514
        %518 = vset.pattern.permute.xlu0 0
        %519 = vperm.xlu0 %518, %v509
        %v520 = vpop.permute.xlu0 %519
        %523 = vset.pattern.permute.xlu0 0
        %524 = vperm.xlu0 %523, %v510
        %v525 = vpop.permute.xlu0 %524
        %528 = vset.pattern.permute.xlu0 0
        %529 = vperm.xlu0 %528, %v511
        %v530 = vpop.permute.xlu0 %529
        %vm532 = vcmask 130048
        %v534 = vsel %vm532, %v504, 0
        %v537 = vsel %vm532, %v505, 0
        %v540 = vsel %vm532, %v506, 0
        %v543 = vsel %vm532, %v507, 0
        %545 = vmatpush.msra.mxu0 0.0
        %546 = vmatpush.msra.mxu0 0.0
        %547 = vmatpush.msra.mxu0 0.0
        %548 = vmatpush.msra.mxu0 0.0
        %549 = vmatpush.msra.mxu0 0.0
        %550 = vmatpush.msra.mxu0 0.0
        %551 = vmatpush.msra.mxu0 0.0
        %552 = vmatpush.msra.mxu0 0.0
        %553 = vmatpush.msra.mxu0 0.0
        %554 = vmatpush.msra.mxu0 0.0
        %555 = vmatpush.msra.mxu0 0.0
        %556 = vmatpush.msra.mxu0 0.0
        %557 = vmatpush.msra.mxu0 0.0
        %558 = vmatpush.msra.mxu0 0.0
        %559 = vmatpush.msra.mxu0 %v502
        %560 = vmatpush.msra.mxu0 %v499
        %561 = vmatmul.f32.gmra.mxu0 %v534
        %v562 = vpop.f32.mrf.mxu0
        %v563 = vadd.f32 %v515, %v562
        %564 = vmatmul.f32.gmra.mxu0 %v537
        %v565 = vpop.f32.mrf.mxu0
        %v566 = vadd.f32 %v520, %v565
        %567 = vmatmul.f32.gmra.mxu0 %v540
        %v568 = vpop.f32.mrf.mxu0
        %v569 = vadd.f32 %v525, %v568
        %570 = vmatmul.f32.gmra.mxu0 %v543
        %v571 = vpop.f32.mrf.mxu0
        %v572 = vadd.f32 %v530, %v571
        %573 = vdwg.mxu0
        %v574 = vmax.f32 %v563, 0.0
        %v575 = vmax.f32 %v566, 0.0
        %v576 = vmax.f32 %v569, 0.0
        %v577 = vmax.f32 %v572, 0.0
        %v578 = vld [vmem:[%s5] sm:$0xff]
        %v579 = vld [vmem:[%s5 + $0x8] sm:$0xff]
        %v580 = vld [vmem:[%s6] sm:$0xff]
        %v581 = vld [vmem:[%s6 + $0x8] sm:$0xff]
        %583 = vset.pattern.permute.xlu0 0
        %584 = vperm.xlu0 %583, %v580
        %v585 = vpop.permute.xlu0 %584
        %588 = vset.pattern.permute.xlu0 0
        %589 = vperm.xlu0 %588, %v581
        %v590 = vpop.permute.xlu0 %589
        %vm592 = vcmask 261120
        %v594 = vsel %vm592, %v578, 0
        %v597 = vsel %vm592, %v579, 0
        %599 = vmatpush.msra.mxu0 0.0
        %600 = vmatpush.msra.mxu0 0.0
        %601 = vmatpush.msra.mxu0 0.0
        %602 = vmatpush.msra.mxu0 0.0
        %603 = vmatpush.msra.mxu0 0.0
        %604 = vmatpush.msra.mxu0 0.0
        %605 = vmatpush.msra.mxu0 0.0
        %606 = vmatpush.msra.mxu0 0.0
        %607 = vmatpush.msra.mxu0 0.0
        %608 = vmatpush.msra.mxu0 0.0
        %609 = vmatpush.msra.mxu0 0.0
        %610 = vmatpush.msra.mxu0 0.0
        %611 = vmatpush.msra.mxu0 %v577
        %612 = vmatpush.msra.mxu0 %v576
        %613 = vmatpush.msra.mxu0 %v575
        %614 = vmatpush.msra.mxu0 %v574
        %615 = vmatmul.f32.gmra.mxu0 %v594
        %v616 = vpop.f32.mrf.mxu0
        %v617 = vadd.f32 %v585, %v616
        %618 = vmatmul.f32.gmra.mxu0 %v597
        %v619 = vpop.f32.mrf.mxu0
        %v620 = vadd.f32 %v590, %v619
        %621 = vdwg.mxu0
        %v622 = vld [vmem:[%s334] sm:$0xff]
        %v623 = vld [vmem:[%s334 + $0x8] sm:$0xff]
        %v624 = vadd.f32 %v622, %v617
        %v625 = vadd.f32 %v623, %v620
        %626 = vst [vmem:[%s375] sm:$0xff] %v624
        %627 = vst [vmem:[%s375 + $0x8] sm:$0xff] %v625
        %s628 = sand.u32 %s215, 1
        %s629 = scalar_lea.sflag [#allocation4], %s628
        %s630 = sand.u32 %s215, 1
        %s631 = smul.addr %s630, 16
        %s632 = scalar_lea.vmem [#allocation7], %s631
        // Predicated region
        $region57: #{tpu_custom_call.1} parent=47 // pred_check
          %p633 = pneg %p225
        $region58: #{tpu_custom_call.1} parent=47 // pred_check_branch
          %635 = sbr.rel (%p633) target = $region60
        $region59: #{tpu_custom_call.1} parent=47 // pred_region
          %637 = vsyncadd %s629, 0
          %s638 = smul.addr %s31, 6
          %s639 = sadd.s32 %s32, %s638
          %s640 = smul.addr %s639, 8
          %s641 = scalar_lea.hbm %s7, %s640
          %s642 = sshll.u32 %s632, 4
          %s643 = int_to_ptr.vmem [resolvable:$true] %s642
          %s644 = sshll.u32 %s641, 4
          %s645 = int_to_ptr.hbm [resolvable:$true] %s644
          %650 = dma.vmem_to_hbm [thread:$0]  %s643, 256, %s645, %s629, 128, 384, 8
        $region60: #{tpu_custom_call.1} parent=47 // pred_fallthru
          _
      $region48: #{tpu_custom_call.1} parent=5 // pred_fallthru
        _
      %p651 = scmp.le.s32.totalorder 2, %s22
      // Predicated region
      $region61: #{tpu_custom_call.1} parent=5 // pred_check
        %p652 = pneg %p651
      $region62: #{tpu_custom_call.1} parent=5 // pred_check_branch
        %654 = sbr.rel (%p652) target = $region64
      $region63: #{tpu_custom_call.1} parent=5 // pred_region
        %s655 = ssub.s32 %s22, 2
        // Predicated region
        $region65: #{tpu_custom_call.1} parent=63 // pred_check
          %p656 = pneg %p231
        $region66: #{tpu_custom_call.1} parent=63 // pred_check_branch
          %658 = sbr.rel (%p656) target = $region68
        $region67: #{tpu_custom_call.1} parent=63 // pred_region
          %s659 = sand.u32 %s216, 1
          %s660 = scalar_lea.sflag [#allocation4], %s659
          %s661 = sand.u32 %s216, 1
          %s662 = smul.addr %s661, 16
          %s663 = scalar_lea.vmem [#allocation7], %s662
          %665 = dma.done %s660, 256
        $region68: #{tpu_custom_call.1} parent=63 // pred_fallthru
          _
      $region64: #{tpu_custom_call.1} parent=5 // pred_fallthru
        _
    $region6: #{tpu_custom_call.1} parent=1 // loop_footer
      %s26 = sadd.s32 1, %s22
    $region7: #{tpu_custom_call.1} parent=1 // loop_footer_branch
      %21 = sbr.rel target = $region3
    $region8: #{tpu_custom_call.1} parent=1 // loop_exit
      _
    %666 = vsyncpa [#allocation3], 1
    %s667 = scalar_lea.sflag [#allocation3], 1
    %668 = vsyncpa %s667, 1
    %669 = vsyncpa [#allocation6], 1
    %s670 = scalar_lea.sflag [#allocation6], 1
    %671 = vsyncpa %s670, 1
    %672 = vsyncpa [#allocation4], 1
    %s673 = scalar_lea.sflag [#allocation4], 1
    %674 = vsyncpa %s673, 1

</llo_original>
